<compile_context>
chip_gen: v7x
topology: tpu7x:2x2x1
jax: 0.10.0
libtpu: 0.0.40
codegen_flags: <defaults>
</compile_context>

<pallas_src>
import jax
import jax.numpy as jnp
from jax import lax
from jax.experimental import pallas as pl
from jax.experimental.pallas import tpu as pltpu


def _instance_loss_kernel(zi_ref, zj_ref, simi_ref, dis_simi_ref, out_ref,
                          pos_acc, neg_acc):
    j = pl.program_id(1)                       # z_j tile axis == reduction (last)
    last_j = pl.num_programs(1) - 1

    # ---- init per row tile ---------------------------------------------------
    @pl.when(j == 0)
    def _():
        pos_acc[...] = jnp.zeros_like(pos_acc)
        neg_acc[...] = jnp.zeros_like(neg_acc)

    zi = zi_ref[...]
    zj = zj_ref[...]

    # ---- compute -------------------------------------------------------------
    # (tm, D) x (tn, D) contracting on D -> (tm, tn).  No explicit z_j
    # transpose; operands stay in their input dtype, accumulate in f32 on MXU.
    sim = lax.dot_general(
        zi, zj,
        dimension_numbers=(((1,), (1,)), ((), ())),
        preferred_element_type=jnp.float32)

    # Masks fused in-kernel; widening cast is a no-op for f32 callers and lets
    # bf16/int8 mask callers halve/quarter the dominant HBM stream.
    mask = simi_ref[...].astype(jnp.float32) + dis_simi_ref[...].astype(jnp.float32)
    pos_acc[...] += jnp.sum(sim * mask, axis=1, keepdims=True)

    # Analytic negative term: sum_k zi.zj_k == zi.(sum_k zj_k).  This replaces
    # the (tm, tn) lane reduce of the unmasked sim with a (tn, D) sublane
    # reduce plus a (tm, D) lane reduce.
    # (Could also ride the MXU as a skinny (tm, D) x (D, 1) matvec; kept on
    #  VPU/XLU here since the kernel is mask-DMA-bound and this lowers
    #  unconditionally.)
    zj_colsum = jnp.sum(zj.astype(jnp.float32), axis=0, keepdims=True)   # (1, D)
    neg_acc[...] += jnp.sum(zi.astype(jnp.float32) * zj_colsum,
                            axis=1, keepdims=True)

    # ---- per-row-tile finalize -------------------------------------------------
    @pl.when(j == last_j)
    def _():
        # reciprocal on the EUP slot; approx=False keeps full accuracy.
        out_ref[...] = pos_acc[...] * pl.reciprocal(neg_acc[...], approx=False)


def _vmem_bytes(tm, tn, d, z_itemsize, m_itemsize):
    mask_bytes = 2 * (2 * tm * tn * m_itemsize)     # two masks, double-buffered
    z_bytes = 2 * (tm + tn) * d * z_itemsize        # double-buffered z tiles
    out_bytes = 2 * tm * 4                          # (tm, 1) f32 output block
    scratch_bytes = 2 * tm * 4                      # pos/neg accumulators
    return mask_bytes + z_bytes + out_bytes + scratch_bytes


_TILE_BUDGET_BYTES = 40 * 1024 * 1024   # headroom inside v7x's 64 MiB VMEM


def _pick_tile(b, d, z_itemsize, m_itemsize, max_tile=None):
    # Prefer the biggest tile that divides B and fits the VMEM budget:
    # per-step pipeline overhead (~0.35us) and z_j re-reads both drop with tile size.
    for t in (1024, 512, 256, 128):
        if max_tile is not None and t > max_tile:
            continue
        if b % t == 0 and _vmem_bytes(t, t, d, z_itemsize, m_itemsize) <= _TILE_BUDGET_BYTES:
            return t
    return b   # small / odd batch: single full-extent tile


def instance_loss_with_sim(z_i, z_j, simi, dis_simi, temperature=1.0,
                           max_tile=None):
    """Pallas TPU implementation of InstanceLossWithSim.forward."""
    # 1/temperature scales pos and neg identically -> cancels exactly in pos/neg.
    del temperature

    assert z_i.ndim == 2 and z_i.shape == z_j.shape
    b, d = z_i.shape
    assert simi.shape == (b, b) and dis_simi.shape == (b, b)

    tm = tn = _pick_tile(b, d, z_i.dtype.itemsize, simi.dtype.itemsize,
                         max_tile=max_tile)
    grid = (b // tm, b // tn)

    footprint = _vmem_bytes(tm, tn, d, z_i.dtype.itemsize, simi.dtype.itemsize)
    vmem_limit = int(min(max(footprint * 5 // 4, 32 * 1024 * 1024),
                         48 * 1024 * 1024))

    # NOTE: D (contraction dim) is kept as a single block; tile it as well if
    # tile*D*dtype approaches the VMEM budget for very large feature dims.
    # TODO(synk): if xprof shows the mask DMA exposed after tiles grow, deepen
    # the mask BlockSpecs with pipeline_mode=pl.Buffered(3).
    ratios = pl.pallas_call(
        _instance_loss_kernel,
        out_shape=jax.ShapeDtypeStruct((b, 1), jnp.float32),
        grid_spec=pltpu.PrefetchScalarGridSpec(
            num_scalar_prefetch=0,
            grid=grid,
            in_specs=[
                pl.BlockSpec((tm, d), lambda i, j: (i, 0)),     # z_i row tile
                pl.BlockSpec((tn, d), lambda i, j: (j, 0)),     # z_j row tile
                pl.BlockSpec((tm, tn), lambda i, j: (i, j)),    # simi tile
                pl.BlockSpec((tm, tn), lambda i, j: (i, j)),    # dis_simi tile
            ],
            out_specs=pl.BlockSpec((tm, 1), lambda i, j: (i, 0)),
            scratch_shapes=[
                pltpu.VMEM((tm, 1), jnp.float32),   # pos accumulator (row tile)
                pltpu.VMEM((tm, 1), jnp.float32),   # neg accumulator (row tile)
            ],
        ),
        compiler_params=pltpu.CompilerParams(
            # Row-tile axis carries no cross-tile state (per-tile partials go
            # straight to the output) -> megacore-shardable on v7x.  The z_j
            # reduction axis stays last and "arbitrary".
            dimension_semantics=("parallel", "arbitrary"),
            vmem_limit_bytes=vmem_limit,
        ),
    )(z_i, z_j, simi, dis_simi)

    # Tiny final reduction (B f32 values) in XLA; negligible next to the kernel.
    return jnp.sum(ratios) / b


def _reference(z_i, z_j, simi, dis_simi, temperature=1.0):
    sim = jnp.matmul(z_i, z_j.T) / temperature
    pos = jnp.sum(sim * simi, axis=1) + jnp.sum(sim * dis_simi, axis=1)
    neg = jnp.sum(sim, axis=1)
    return jnp.sum(pos / neg) / z_i.shape[0]


if __name__ == "__main__":
    key = jax.random.PRNGKey(0)
    k1, k2, k3, k4, k5, k6 = jax.random.split(key, 6)

    # Small case consistent with the module (single-tile path).
    B, D = 8, 32
    z_i = jax.random.normal(k1, (B, D), dtype=jnp.float32)
    z_j = jax.random.normal(k2, (B, D), dtype=jnp.float32)
    simi = jax.random.uniform(k3, (B, B), dtype=jnp.float32)
    dis_simi = jax.random.uniform(k4, (B, B), dtype=jnp.float32)

    loss = jax.block_until_ready(
        instance_loss_with_sim(z_i, z_j, simi, dis_simi, temperature=0.5))
    ref = _reference(z_i, z_j, simi, dis_simi, temperature=0.5)
    assert jnp.allclose(loss, ref, rtol=1e-4, atol=1e-5), (loss, ref)

    # Tiled case: force 256-row tiles -> 2x2 grid exercising the "parallel"
    # row axis and the "arbitrary" reduction axis.  Positive features keep the
    # row sums of sim well away from zero (the reference itself is undefined
    # for near-zero row sums).
    B2, D2 = 512, 128
    z_i2 = jax.random.uniform(k5, (B2, D2), dtype=jnp.float32,
                              minval=0.1, maxval=1.0)
    z_j2 = jax.random.uniform(k6, (B2, D2), dtype=jnp.float32,
                              minval=0.1, maxval=1.0)
    simi2 = jax.random.uniform(k3, (B2, B2), dtype=jnp.float32)
    dis_simi2 = jax.random.uniform(k4, (B2, B2), dtype=jnp.float32)

    loss2 = jax.block_until_ready(
        instance_loss_with_sim(z_i2, z_j2, simi2, dis_simi2, temperature=1.0,
                               max_tile=256))
    ref2 = _reference(z_i2, z_j2, simi2, dis_simi2, temperature=1.0)
    assert jnp.allclose(loss2, ref2, rtol=1e-4, atol=1e-5), (loss2, ref2)

    print("KERNEL_OK")
</pallas_src>

<mosaic_0001>
module attributes {stable_mosaic.version = 11 : i64} {
  func.func @_instance_loss_kernel(%arg0: i32, %arg1: i32, %arg2: memref<8x32xf32, #tpu.memory_space<vmem>>, %arg3: memref<8x32xf32, #tpu.memory_space<vmem>>, %arg4: memref<8x8xf32, #tpu.memory_space<vmem>>, %arg5: memref<8x8xf32, #tpu.memory_space<vmem>>, %arg6: memref<8x1xf32, #tpu.memory_space<vmem>>, %arg7: memref<8x1xf32, #tpu.memory_space<vmem>>, %arg8: memref<8x1xf32, #tpu.memory_space<vmem>>) attributes {dimension_semantics = [#tpu.dimension_semantics<parallel>, #tpu.dimension_semantics<arbitrary>], iteration_bounds = array<i64: 1, 1>, scalar_prefetch = 0 : i64, scratch_operands = 2 : i64, tpu.core_type = #tpu.core_type<tc>, window_params = [{transform_indices = @transform_0, window_bounds = array<i64: 8, 32>}, {transform_indices = @transform_1, window_bounds = array<i64: 8, 32>}, {transform_indices = @transform_2, window_bounds = array<i64: 8, 8>}, {transform_indices = @transform_3, window_bounds = array<i64: 8, 8>}, {transform_indices = @transform_4, window_bounds = array<i64: 8, 1>}]} {
    %c0_i32 = arith.constant 0 : i32
    %0 = arith.cmpi eq, %arg1, %c0_i32 : i32
    %1 = arith.extui %0 : i1 to i32
    %c0_i32_0 = arith.constant 0 : i32
    %2 = arith.cmpi ne, %1, %c0_i32_0 : i32
    scf.if %2 {
      %cst_21 = arith.constant 0.000000e+00 : f32
      %27 = vector.broadcast %cst_21 : f32 to vector<8x1xf32>
      %c0_22 = arith.constant 0 : index
      %c0_23 = arith.constant 0 : index
      %28 = vector.load %arg7[%c0_22, %c0_23] : memref<8x1xf32, #tpu.memory_space<vmem>>, vector<8x1xf32>
      tpu.vector_store %arg7[%c0_22, %c0_23], %27 {strides = array<i32>} : memref<8x1xf32, #tpu.memory_space<vmem>>, vector<8x1xf32>,
      %cst_24 = arith.constant 0.000000e+00 : f32
      %29 = vector.broadcast %cst_24 : f32 to vector<8x1xf32>
      %c0_25 = arith.constant 0 : index
      %c0_26 = arith.constant 0 : index
      %30 = vector.load %arg8[%c0_25, %c0_26] : memref<8x1xf32, #tpu.memory_space<vmem>>, vector<8x1xf32>
      tpu.vector_store %arg8[%c0_25, %c0_26], %29 {strides = array<i32>} : memref<8x1xf32, #tpu.memory_space<vmem>>, vector<8x1xf32>,
    } else {
    }
    %c0 = arith.constant 0 : index
    %c0_1 = arith.constant 0 : index
    %3 = vector.load %arg2[%c0, %c0_1] : memref<8x32xf32, #tpu.memory_space<vmem>>, vector<8x32xf32>
    %c0_2 = arith.constant 0 : index
    %c0_3 = arith.constant 0 : index
    %4 = vector.load %arg3[%c0_2, %c0_3] : memref<8x32xf32, #tpu.memory_space<vmem>>, vector<8x32xf32>
    %cst = arith.constant dense<0.000000e+00> : vector<8x8xf32>
    %5 = tpu.matmul %3, %4, %cst {dimension_numbers = #tpu.dot_dimension_numbers<[1], [1], [0], [0], [0, 0, 1, 0], [], []>} : vector<8x32xf32>, vector<8x32xf32>, vector<8x8xf32> -> vector<8x8xf32>
    %c0_4 = arith.constant 0 : index
    %c0_5 = arith.constant 0 : index
    %6 = vector.load %arg4[%c0_4, %c0_5] : memref<8x8xf32, #tpu.memory_space<vmem>>, vector<8x8xf32>
    %c0_6 = arith.constant 0 : index
    %c0_7 = arith.constant 0 : index
    %7 = vector.load %arg5[%c0_6, %c0_7] : memref<8x8xf32, #tpu.memory_space<vmem>>, vector<8x8xf32>
    %8 = arith.addf %6, %7 : vector<8x8xf32>
    %c0_8 = arith.constant 0 : index
    %c0_9 = arith.constant 0 : index
    %9 = vector.load %arg7[%c0_8, %c0_9] : memref<8x1xf32, #tpu.memory_space<vmem>>, vector<8x1xf32>
    %10 = arith.mulf %5, %8 : vector<8x8xf32>
    %cst_10 = arith.constant dense<0.000000e+00> : vector<8xf32>
    %11 = vector.multi_reduction <add>, %10, %cst_10 [1] : vector<8x8xf32> to vector<8xf32>
    %12 = vector.shape_cast %11 : vector<8xf32> to vector<8x1xf32>
    %13 = arith.addf %9, %12 : vector<8x1xf32>
    %c0_11 = arith.constant 0 : index
    %c0_12 = arith.constant 0 : index
    %14 = vector.load %arg7[%c0_11, %c0_12] : memref<8x1xf32, #tpu.memory_space<vmem>>, vector<8x1xf32>
    tpu.vector_store %arg7[%c0_11, %c0_12], %13 {strides = array<i32>} : memref<8x1xf32, #tpu.memory_space<vmem>>, vector<8x1xf32>,
    %cst_13 = arith.constant dense<0.000000e+00> : vector<32xf32>
    %15 = vector.multi_reduction <add>, %4, %cst_13 [0] : vector<8x32xf32> to vector<32xf32>
    %16 = vector.shape_cast %15 : vector<32xf32> to vector<1x32xf32>
    %c0_14 = arith.constant 0 : index
    %c0_15 = arith.constant 0 : index
    %17 = vector.load %arg8[%c0_14, %c0_15] : memref<8x1xf32, #tpu.memory_space<vmem>>, vector<8x1xf32>
    %18 = vector.broadcast %16 : vector<1x32xf32> to vector<8x32xf32>
    %19 = arith.mulf %3, %18 : vector<8x32xf32>
    %cst_16 = arith.constant dense<0.000000e+00> : vector<8xf32>
    %20 = vector.multi_reduction <add>, %19, %cst_16 [1] : vector<8x32xf32> to vector<8xf32>
    %21 = vector.shape_cast %20 : vector<8xf32> to vector<8x1xf32>
    %22 = arith.addf %17, %21 : vector<8x1xf32>
    %c0_17 = arith.constant 0 : index
    %c0_18 = arith.constant 0 : index
    %23 = vector.load %arg8[%c0_17, %c0_18] : memref<8x1xf32, #tpu.memory_space<vmem>>, vector<8x1xf32>
    tpu.vector_store %arg8[%c0_17, %c0_18], %22 {strides = array<i32>} : memref<8x1xf32, #tpu.memory_space<vmem>>, vector<8x1xf32>,
    %c0_i32_19 = arith.constant 0 : i32
    %24 = arith.cmpi eq, %arg1, %c0_i32_19 : i32
    %25 = arith.extui %24 : i1 to i32
    %c0_i32_20 = arith.constant 0 : i32
    %26 = arith.cmpi ne, %25, %c0_i32_20 : i32
    scf.if %26 {
      %c0_21 = arith.constant 0 : index
      %c0_22 = arith.constant 0 : index
      %27 = vector.load %arg7[%c0_21, %c0_22] : memref<8x1xf32, #tpu.memory_space<vmem>>, vector<8x1xf32>
      %c0_23 = arith.constant 0 : index
      %c0_24 = arith.constant 0 : index
      %28 = vector.load %arg8[%c0_23, %c0_24] : memref<8x1xf32, #tpu.memory_space<vmem>>, vector<8x1xf32>
      %29 = tpu.reciprocal %28 : vector<8x1xf32> -> vector<8x1xf32>
      %30 = arith.mulf %27, %29 : vector<8x1xf32>
      %c0_25 = arith.constant 0 : index
      %c0_26 = arith.constant 0 : index
      %31 = vector.load %arg6[%c0_25, %c0_26] : memref<8x1xf32, #tpu.memory_space<vmem>>, vector<8x1xf32>
      tpu.vector_store %arg6[%c0_25, %c0_26], %30 {strides = array<i32>} : memref<8x1xf32, #tpu.memory_space<vmem>>, vector<8x1xf32>,
    } else {
    }
    return
  }
  func.func @transform_0(%arg0: i32, %arg1: i32) -> (i32, i32) {
    %c0_i32 = arith.constant 0 : i32
    %c0_i32_0 = arith.constant 0 : i32
    return %arg0, %c0_i32 : i32, i32
  }
  func.func @transform_1(%arg0: i32, %arg1: i32) -> (i32, i32) {
    %c0_i32 = arith.constant 0 : i32
    %c0_i32_0 = arith.constant 0 : i32
    return %arg1, %c0_i32 : i32, i32
  }
  func.func @transform_2(%arg0: i32, %arg1: i32) -> (i32, i32) {
    %c0_i32 = arith.constant 0 : i32
    return %arg0, %arg1 : i32, i32
  }
  func.func @transform_3(%arg0: i32, %arg1: i32) -> (i32, i32) {
    %c0_i32 = arith.constant 0 : i32
    return %arg0, %arg1 : i32, i32
  }
  func.func @transform_4(%arg0: i32, %arg1: i32) -> (i32, i32) {
    %c0_i32 = arith.constant 0 : i32
    %c0_i32_0 = arith.constant 0 : i32
    return %arg0, %c0_i32 : i32, i32
  }
}

</mosaic_0001>

<llo_original>
// kernel: tpu_custom_call.1
$region0: #{tpu_custom_call.1}
  #allocation0 [shape = 'u32[]', space=smem, size = 0x4, offset = 0x4, fixed_abs, tag = 'smem constant byte address 0x4 - core index']
  #allocation1 [shape = 'u32[144,128]{1,0:T(1,128)}', space=vmem, size = 0x12000, scoped, tag = 'internal scratch']
  #allocation2 [shape = 'f32[8,1]{1,0:T(8,128)}', space=vmem, size = 0x1000, scoped, tag = 'scratch operand']
  #allocation3 [shape = 'f32[8,1]{1,0:T(8,128)}', space=vmem, size = 0x1000, scoped, tag = 'scratch operand']
  %s0 = inlined_call_operand.hbm [shape: f32[8,32], index: 0, kind: input, shape index: {}]
  %s1 = inlined_call_operand.hbm [shape: f32[8,32], index: 1, kind: input, shape index: {}]
  %s2 = inlined_call_operand.hbm [shape: f32[8,8], index: 2, kind: input, shape index: {}]
  %s3 = inlined_call_operand.vmem [shape: f32[8,8], index: 3, kind: input, shape index: {}]
  %s4 = inlined_call_operand.vmem [shape: f32[8,1], index: 4, kind: output, shape index: {}]
  %s5 = sld [smem:[#allocation0]]
  $region46: #{tpu_custom_call.1} parent=0
    _
  %s7 = ssub.s32 1, %s5
  %s8 = scalar_select 0, %s7, %s5
  $region1: #{tpu_custom_call.1} parent=0
    #allocation4 [shape = 'u8[4096]{0}', space=vmem, size = 0x1000, scoped, tag = 'input window, operand 0, single buffered']
    #allocation5 [shape = 's32[1]{0}', space=sflag, size = 0x4, scoped, tag = 'scoped memory for tpu_custom_call.1']
    #allocation6 [shape = 'u8[4096]{0}', space=vmem, size = 0x1000, scoped, tag = 'input window, operand 1, single buffered']
    #allocation7 [shape = 's32[1]{0}', space=sflag, size = 0x4, scoped, tag = 'scoped memory for tpu_custom_call.1']
    #allocation8 [shape = 'u8[4096]{0}', space=vmem, size = 0x1000, scoped, tag = 'input window, operand 2, single buffered']
    %9 = vsyncpa [#allocation5], 0
    %10 = vsyncpa [#allocation7], 0
    // Predicated region
    $region2: #{tpu_custom_call.1} parent=1 // pred_check
      _
    $region3: #{tpu_custom_call.1} parent=1 // pred_check_branch
      %12 = sbr.rel (0) target = $region5
    $region4: #{tpu_custom_call.1} parent=1 // pred_region
      %s14 = ssub.s32 128, 128
      %15 = vsyncadd [#allocation5], %s14
      %s17 = sshll.u32 [#allocation4], 4
      %s18 = int_to_ptr.vmem [resolvable:$true] %s17
      %20 = dma.hbm_to_vmem [thread:$0]  %s0, 128, %s18, [#allocation5]
    $region5: #{tpu_custom_call.1} parent=1 // pred_fallthru
      _
    // Predicated region
    $region6: #{tpu_custom_call.1} parent=1 // pred_check
      _
    $region7: #{tpu_custom_call.1} parent=1 // pred_check_branch
      %22 = sbr.rel (0) target = $region9
    $region8: #{tpu_custom_call.1} parent=1 // pred_region
      %s24 = ssub.s32 128, 128
      %25 = vsyncadd [#allocation7], %s24
      %s27 = sshll.u32 [#allocation6], 4
      %s28 = int_to_ptr.vmem [resolvable:$true] %s27
      %30 = dma.hbm_to_vmem [thread:$0]  %s1, 128, %s28, [#allocation7]
    $region9: #{tpu_custom_call.1} parent=1 // pred_fallthru
      _
    // Predicated region
    $region10: #{tpu_custom_call.1} parent=1 // pred_check
      _
    $region11: #{tpu_custom_call.1} parent=1 // pred_check_branch
      %32 = sbr.rel (0) target = $region13
    $region12: #{tpu_custom_call.1} parent=1 // pred_region
      %s34 = ssub.s32 128, 128
      %35 = vsyncadd [#allocation7], %s34
      %s37 = sshll.u32 [#allocation8], 4
      %s38 = int_to_ptr.vmem [resolvable:$true] %s37
      %40 = dma.hbm_to_vmem [thread:$0]  %s2, 128, %s38, [#allocation7]
    $region13: #{tpu_custom_call.1} parent=1 // pred_fallthru
      _
    // Predicated region
    $region14: #{tpu_custom_call.1} parent=1 // pred_check
      _
    $region15: #{tpu_custom_call.1} parent=1 // pred_check_branch
      %42 = sbr.rel (0) target = $region17
    $region16: #{tpu_custom_call.1} parent=1 // pred_region
      _
    $region17: #{tpu_custom_call.1} parent=1 // pred_fallthru
      _
    // Predicated region
    $region18: #{tpu_custom_call.1} parent=1 // pred_check
      _
    $region19: #{tpu_custom_call.1} parent=1 // pred_check_branch
      %44 = sbr.rel (0) target = $region21
    $region20: #{tpu_custom_call.1} parent=1 // pred_region
      %45 = dma.done [#allocation5], 128
    $region21: #{tpu_custom_call.1} parent=1 // pred_fallthru
      _
    // Predicated region
    $region22: #{tpu_custom_call.1} parent=1 // pred_check
      _
    $region23: #{tpu_custom_call.1} parent=1 // pred_check_branch
      %47 = sbr.rel (0) target = $region25
    $region24: #{tpu_custom_call.1} parent=1 // pred_region
      %48 = dma.done [#allocation7], 128
    $region25: #{tpu_custom_call.1} parent=1 // pred_fallthru
      _
    // Predicated region
    $region26: #{tpu_custom_call.1} parent=1 // pred_check
      _
    $region27: #{tpu_custom_call.1} parent=1 // pred_check_branch
      %50 = sbr.rel (0) target = $region29
    $region28: #{tpu_custom_call.1} parent=1 // pred_region
      %51 = dma.done [#allocation7], 128
    $region29: #{tpu_custom_call.1} parent=1 // pred_fallthru
      _
    %p52 = scmp.eq.s32.totalorder 0, 0
    // Predicated region
    $region30: #{tpu_custom_call.1} parent=1 // pred_check
      %p53 = pneg %p52
    $region31: #{tpu_custom_call.1} parent=1 // pred_check_branch
      %55 = sbr.rel (%p53) target = $region33
    $region32: #{tpu_custom_call.1} parent=1 // pred_region
      %vm56 = vcmask 7168
      %57 = vst.msk [vmem:[#allocation2] sm:$0xff] %vm56, 0.0
      %58 = vst.msk [vmem:[#allocation3] sm:$0xff] %vm56, 0.0
    $region33: #{tpu_custom_call.1} parent=1 // pred_fallthru
      _
    %v59 = vld [vmem:[#allocation4] sm:$0xff]
    %v60 = vld [vmem:[#allocation6] sm:$0xff]
    %vm61 = vcmask 261120
    %v63 = vsel %vm61, %v59, 0
    %v66 = vsel %vm61, %v60, 0
    %68 = vmatprep.subr.mxu0 0.0
    %69 = vmatpush1.xpose.msra.mxu0 %v66
    %70 = vmatprep.subr.mxu0 0.0
    %71 = vmatpush1.xpose.msra.mxu0 0.0
    %72 = vmatprep.subr.mxu0 0.0
    %73 = vmatpush1.xpose.msra.mxu0 0.0
    %74 = vmatprep.subr.mxu0 0.0
    %75 = vmatpush1.xpose.msra.mxu0 0.0
    %76 = vmatprep.subr.mxu0 0.0
    %77 = vmatpush1.xpose.msra.mxu0 0.0
    %78 = vmatprep.subr.mxu0 0.0
    %79 = vmatpush1.xpose.msra.mxu0 0.0
    %80 = vmatprep.subr.mxu0 0.0
    %81 = vmatpush1.xpose.msra.mxu0 0.0
    %82 = vmatprep.subr.mxu0 0.0
    %83 = vmatpush1.xpose.msra.mxu0 0.0
    %84 = vmatprep.subr.mxu0 0.0
    %85 = vmatpush1.xpose.msra.mxu0 0.0
    %86 = vmatprep.subr.mxu0 0.0
    %87 = vmatpush1.xpose.msra.mxu0 0.0
    %88 = vmatprep.subr.mxu0 0.0
    %89 = vmatpush1.xpose.msra.mxu0 0.0
    %90 = vmatprep.subr.mxu0 0.0
    %91 = vmatpush1.xpose.msra.mxu0 0.0
    %92 = vmatprep.subr.mxu0 0.0
    %93 = vmatpush1.xpose.msra.mxu0 0.0
    %94 = vmatprep.subr.mxu0 0.0
    %95 = vmatpush1.xpose.msra.mxu0 0.0
    %96 = vmatprep.subr.mxu0 0.0
    %97 = vmatpush1.xpose.msra.mxu0 0.0
    %98 = vmatprep.subr.mxu0 0.0
    %99 = vmatpush1.xpose.msra.mxu0 0.0
    %100 = vmatprep.subr.mxu0 0.0
    %101 = vmatpush1.xpose.msra.mxu0 0.0
    %102 = vmatprep.subr.mxu0 0.0
    %103 = vmatpush1.xpose.msra.mxu0 0.0
    %104 = vmatprep.subr.mxu0 0.0
    %105 = vmatpush1.xpose.msra.mxu0 0.0
    %106 = vmatprep.subr.mxu0 0.0
    %107 = vmatpush1.xpose.msra.mxu0 0.0
    %108 = vmatprep.subr.mxu0 0.0
    %109 = vmatpush1.xpose.msra.mxu0 0.0
    %110 = vmatprep.subr.mxu0 0.0
    %111 = vmatpush1.xpose.msra.mxu0 0.0
    %112 = vmatprep.subr.mxu0 0.0
    %113 = vmatpush1.xpose.msra.mxu0 0.0
    %114 = vmatprep.subr.mxu0 0.0
    %115 = vmatpush1.xpose.msra.mxu0 0.0
    %116 = vmatprep.subr.mxu0 0.0
    %117 = vmatpush1.xpose.msra.mxu0 0.0
    %118 = vmatprep.subr.mxu0 0.0
    %119 = vmatpush1.xpose.msra.mxu0 0.0
    %120 = vmatprep.subr.mxu0 0.0
    %121 = vmatpush1.xpose.msra.mxu0 0.0
    %122 = vmatprep.subr.mxu0 0.0
    %123 = vmatpush1.xpose.msra.mxu0 0.0
    %124 = vmatprep.subr.mxu0 0.0
    %125 = vmatpush1.xpose.msra.mxu0 0.0
    %126 = vmatprep.subr.mxu0 0.0
    %127 = vmatpush1.xpose.msra.mxu0 0.0
    %128 = vmatprep.subr.mxu0 0.0
    %129 = vmatpush1.xpose.msra.mxu0 0.0
    %130 = vmatprep.subr.mxu0 0.0
    %131 = vmatpush1.xpose.msra.mxu0 0.0
    %132 = vmatprep.mubr.f32.mxu0 0.0
    %133 = vmatmul.mubr.f32.gmra.mrb[0].mxu0 %v63
    %v134 = vpop.f32.mrb[0].mxu0
    %v135 = vadd.f32 0.0, %v134
    %v136 = vpop.f32.mrb[0].mxu0
    %137 = vdwg.mxu0
    %v138 = vld [vmem:[#allocation8] sm:$0xff]
    %v139 = vld [vmem:[%s3] sm:$0xff]
    %v140 = vadd.f32 %v138, %v139
    %v141 = vld [vmem:[#allocation2] sm:$0xff]
    %v142 = vmul.f32 %v135, %v140
    %vm143 = vcmask 64512
    %v144 = vsel %vm143, %v142, 0.0
    %145 = vadd.xlane.f32.xlu0 %v144
    %v146 = vpop.xlane.xlu0 %145
    %v147 = vadd.f32 %v141, %v146
    %vm148 = vcmask 7168
    %149 = vst.msk [vmem:[#allocation2] sm:$0xff] %vm148, %v147
    %v150 = vsel %vm61, %v60, 0.0
    %v151 = vrot.slane %v150, 4
    %v152 = vadd.f32 %v150, %v151
    %v153 = vrot.slane %v152, 2
    %v154 = vadd.f32 %v152, %v153
    %v155 = vrot.slane %v154, 1
    %v156 = vadd.f32 %v154, %v155
    %v157 = vld [vmem:[#allocation3] sm:$0xff]
    %v158 = vmul.f32 %v59, %v156
    %v159 = vsel %vm61, %v158, 0.0
    %160 = vadd.xlane.f32.xlu0 %v159
    %v161 = vpop.xlane.xlu0 %160
    %v162 = vadd.f32 %v157, %v161
    %163 = vst.msk [vmem:[#allocation3] sm:$0xff] %vm148, %v162
    // Predicated region
    $region34: #{tpu_custom_call.1} parent=1 // pred_check
      %p164 = pneg %p52
    $region35: #{tpu_custom_call.1} parent=1 // pred_check_branch
      %166 = sbr.rel (%p164) target = $region37
    $region36: #{tpu_custom_call.1} parent=1 // pred_region
      %v167 = vld [vmem:[#allocation2] sm:$0xff]
      %v168 = vld [vmem:[#allocation3] sm:$0xff]
      %v169 = vrcp.pop %v168
      %v170 = vmul.f32 %v167, %v169
      %171 = vst.msk [vmem:[%s4] sm:$0xff] %vm148, %v170
    $region37: #{tpu_custom_call.1} parent=1 // pred_fallthru
      _
    // Predicated region
    $region38: #{tpu_custom_call.1} parent=1 // pred_check
      _
    $region39: #{tpu_custom_call.1} parent=1 // pred_check_branch
      %173 = sbr.rel (0) target = $region41
    $region40: #{tpu_custom_call.1} parent=1 // pred_region
      _
    $region41: #{tpu_custom_call.1} parent=1 // pred_fallthru
      _
    // Predicated region
    $region42: #{tpu_custom_call.1} parent=1 // pred_check
      _
    $region43: #{tpu_custom_call.1} parent=1 // pred_check_branch
      %175 = sbr.rel (0) target = $region45
    $region44: #{tpu_custom_call.1} parent=1 // pred_region
      _
    $region45: #{tpu_custom_call.1} parent=1 // pred_fallthru
      _
    %176 = vsyncpa [#allocation5], 1
    %177 = vsyncpa [#allocation7], 1

</llo_original>
